<compile_context>
chip_gen: v7x
topology: tpu7x:2x2x1
jax: 0.10.0
libtpu: 0.0.40
codegen_flags: <defaults>
</compile_context>

<pallas_src>
import functools

import jax
import jax.numpy as jnp
from jax import lax
from jax.experimental import pallas as pl
from jax.experimental.pallas import tpu as pltpu

ALPHA = 0.25
GAMMA = 2.0          # kernel specializes gamma == 2 (w*w instead of pow)
REDUCTION = "mean"   # matches the PyTorch module default

_MIB = 1024 * 1024
_TARGET_ROW_BYTES = 512  # (tile_n, 1) int32 pads to 128 lanes -> 512 B of VMEM per row


def _cdiv(a, b):
    return -(-a // b)


def _tpu_config():
    """(per-buffer logits byte budget, vmem_limit_bytes, core splits) per TPU generation."""
    try:
        kind = jax.devices()[0].device_kind.lower()
    except Exception:
        kind = ""
    if "v7" in kind:
        # 64 MiB physical VMEM, 2 TensorCores per chip: smaller tiles, 2-way split.
        return 6 * _MIB, 40 * _MIB, 2
    if any(g in kind for g in ("v6", "v5", "v4")):
        # 128 MiB physical VMEM, single TensorCore (v5e/v6e): big tiles, no split.
        return 14 * _MIB, 56 * _MIB, 1
    # Unknown chip: conservative numbers that fit every generation.
    return 6 * _MIB, 40 * _MIB, 1


def _choose_tile_n(n, c, itemsize, budget_bytes):
    # Size tiles purely by bytes (no row cap): per batch row one buffer holds the
    # logits row plus the lane-padded (tile_n, 1) int32 targets row (512 B).
    bytes_per_row = c * itemsize + _TARGET_ROW_BYTES
    rows = max(8, budget_bytes // bytes_per_row)
    rows = max(8, (rows // 8) * 8)
    if n <= rows:
        return n            # block == full array dim: always a legal block shape
    return rows


def _focal_loss_kernel(logits_ref, targets_ref, out_ref, *,
                       n_total, tile_n, tiles_per_core, num_tiles,
                       two_axes, guard_overhang):
    if two_axes:
        core = pl.program_id(0)   # core-parallel split of the batch (v7x)
        i = pl.program_id(1)      # "arbitrary" reduction axis over batch tiles
    else:
        core = 0
        i = pl.program_id(0)
    tile_id = core * tiles_per_core + i

    # Output block is resident across the inner axis -> use it as the accumulator.
    @pl.when(i == 0)
    def _():
        out_ref[...] = jnp.zeros_like(out_ref)

    def compute():
        # bf16 (or other low-precision) logits stream at native width and are
        # upcast per-tile here, halving HBM traffic vs pre-casting in the wrapper.
        logits = logits_ref[...].astype(jnp.float32)      # (tile_n, C)
        tgt = targets_ref[...]                            # (tile_n, 1) int32
        tn, c = logits.shape

        # One-hot pick of the target logit (no dynamic vector gather on TPU).
        # NOTE: out-of-range / negative targets (e.g. ignore_index=-100) silently
        # contribute a 0 target-logit; PyTorch's NLL path would raise instead.
        col_ids = lax.broadcasted_iota(jnp.int32, (tn, c), 1)
        onehot = col_ids == tgt

        # Numerically stable cross-entropy.  pt is recovered per-row as exp(-ce)
        # on the otherwise-idle EUP slot instead of a second C-wide one-hot
        # select + cross-lane reduction (removes one VPU select + one XLU reduce).
        m = jnp.max(logits, axis=-1, keepdims=True)
        shifted = logits - m
        sum_exp = jnp.sum(jnp.exp(shifted), axis=-1, keepdims=True)
        tgt_shifted = jnp.sum(jnp.where(onehot, shifted, 0.0), axis=-1,
                              keepdims=True)
        ce = jnp.log(sum_exp) - tgt_shifted               # (tile_n, 1) per-row CE
        pt = jnp.exp(-ce)
        w = 1.0 - pt
        # gamma == 2.0 specialization: w*w stays on the VPU (a float pow lowers
        # via exp*log on the single EUP port and risks log(0) as pt -> 1).
        focal = ALPHA * (w * w) * ce

        # Mask rows past N (padded tail of a partial last tile).  Keep this a
        # select, not a multiply: padded rows can hold garbage / NaN.
        row_ids = lax.broadcasted_iota(jnp.int32, (tn, 1), 0)
        global_rows = tile_id * tile_n + row_ids
        focal = jnp.where(global_rows < n_total, focal, 0.0)

        out_ref[...] = out_ref[...] + jnp.sum(focal)      # per-core partial sum

    if guard_overhang:
        # Skip compute (the clamped DMA still happens) on overhang tiles of the
        # core split; all their rows are >= N anyway.
        pl.when(tile_id < num_tiles)(compute)
    else:
        compute()


def focal_loss(logits: jax.Array, targets: jax.Array, *,
               block_rows=None, reduction=REDUCTION) -> jax.Array:
    """logits: (N, C) float (f32 or bf16); targets: (N,) int class ids. Scalar f32 loss."""
    n, c = logits.shape
    targets2d = targets.astype(jnp.int32).reshape(n, 1)

    logits_budget, vmem_limit, max_splits = _tpu_config()

    # TODO(synk): for C < 128 the lane dim is under-utilized (C=8 wastes 15/16 of
    # each vreg); a lane-dense repack (128//C rows per vreg row + segment-masked
    # reductions) would recover up to 128/C x VPU/VMEM efficiency.

    if block_rows is None:
        tile_n = _choose_tile_n(n, c, logits.dtype.itemsize, logits_budget)
    else:
        tile_n = min(int(block_rows), n)
        if tile_n < n:
            tile_n = max(8, (tile_n // 8) * 8)

    num_tiles = _cdiv(n, tile_n)
    splits = min(max_splits, num_tiles)
    tiles_per_core = _cdiv(num_tiles, splits)
    guard_overhang = splits * tiles_per_core > num_tiles
    two_axes = splits > 1

    kernel = functools.partial(
        _focal_loss_kernel,
        n_total=n, tile_n=tile_n, tiles_per_core=tiles_per_core,
        num_tiles=num_tiles, two_axes=two_axes, guard_overhang=guard_overhang)

    cost = pl.CostEstimate(
        flops=7 * n * c,
        transcendentals=n * c + 2 * n,
        bytes_accessed=n * c * logits.dtype.itemsize + 4 * n + 4 * splits)

    if two_axes:
        def in_map(core, i):
            # Clamp the overhang when splits * tiles_per_core > num_tiles; the
            # kernel skips compute there so the redundant block contributes 0.
            return (jnp.minimum(core * tiles_per_core + i, num_tiles - 1), 0)

        grid = (splits, tiles_per_core)
        in_specs = [pl.BlockSpec((tile_n, c), in_map),
                    # (tile_n, 1) int32 lane-pads in VMEM; accounted for in the
                    # byte budget above rather than repacked.
                    pl.BlockSpec((tile_n, 1), in_map)]
        out_specs = pl.BlockSpec((1, 1, 1), lambda core, i: (core, 0, 0))
        if hasattr(pltpu, "CORE_PARALLEL"):
            # TODO(synk): confirm on a v7x xprof trace that both TensorCores are
            # busy; if not, restructure with pl.core_map over a tensorcore mesh.
            dim_sems = (pltpu.CORE_PARALLEL, pltpu.ARBITRARY)
        else:
            dim_sems = ("parallel", "arbitrary")
    else:
        grid = (num_tiles,)
        in_specs = [pl.BlockSpec((tile_n, c), lambda i: (i, 0)),
                    pl.BlockSpec((tile_n, 1), lambda i: (i, 0))]
        out_specs = pl.BlockSpec((1, 1, 1), lambda i: (0, 0, 0))
        dim_sems = ("arbitrary",)

    partial_sums = pl.pallas_call(
        kernel,
        out_shape=jax.ShapeDtypeStruct((splits, 1, 1), jnp.float32),
        grid=grid,
        in_specs=in_specs,
        out_specs=out_specs,
        compiler_params=pltpu.CompilerParams(
            dimension_semantics=dim_sems,
            vmem_limit_bytes=vmem_limit),
        cost_estimate=cost,
    )(logits, targets2d)

    total = jnp.sum(partial_sums)
    if reduction == "mean":
        return total / jnp.float32(n)
    elif reduction == "sum":
        return total
    else:
        # TODO(synk): reduction='none' needs an (N,)-shaped output spec.
        raise NotImplementedError(
            "reduction='none' is not implemented in the Pallas focal-loss kernel")


def _focal_loss_ref(logits, targets):
    # pure-JAX reference for sanity checking
    logp = jax.nn.log_softmax(logits.astype(jnp.float32), axis=-1)
    ce = -jnp.take_along_axis(logp, targets[:, None].astype(jnp.int32), axis=-1)[:, 0]
    pt = jnp.exp(-ce)
    return jnp.mean(ALPHA * (1.0 - pt) ** GAMMA * ce)


if __name__ == "__main__":
    key = jax.random.PRNGKey(0)
    k1, k2, k3, k4, k5, k6 = jax.random.split(key, 6)

    # Small case: single tile, small class count.
    n1, c1 = 32, 8
    logits1 = jax.random.normal(k1, (n1, c1), dtype=jnp.float32)
    targets1 = jax.random.randint(k2, (n1,), 0, c1, dtype=jnp.int32)
    loss1 = focal_loss(logits1, targets1)
    jax.block_until_ready(loss1)
    ref1 = _focal_loss_ref(logits1, targets1)
    assert jnp.allclose(loss1, ref1, rtol=1e-4, atol=1e-6), (loss1, ref1)

    # Tiled case: forces multiple grid steps and a partial (masked) last tile.
    n2, c2 = 200, 40
    logits2 = jax.random.normal(k3, (n2, c2), dtype=jnp.float32)
    targets2 = jax.random.randint(k4, (n2,), 0, c2, dtype=jnp.int32)
    loss2 = focal_loss(logits2, targets2, block_rows=48)
    jax.block_until_ready(loss2)
    ref2 = _focal_loss_ref(logits2, targets2)
    assert jnp.allclose(loss2, ref2, rtol=1e-4, atol=1e-6), (loss2, ref2)

    # bf16 streaming case (native-width DMA, in-kernel upcast), lane-filling C=128.
    n3, c3 = 64, 128
    logits3 = jax.random.normal(k5, (n3, c3), dtype=jnp.float32).astype(jnp.bfloat16)
    targets3 = jax.random.randint(k6, (n3,), 0, c3, dtype=jnp.int32)
    loss3 = focal_loss(logits3, targets3)
    jax.block_until_ready(loss3)
    ref3 = _focal_loss_ref(logits3, targets3)
    assert jnp.allclose(loss3, ref3, rtol=1e-4, atol=1e-6), (loss3, ref3)

    print("KERNEL_OK")
</pallas_src>

<mosaic_0001>
module attributes {stable_mosaic.version = 11 : i64} {
  func.func @_focal_loss_kernel(%arg0: i32, %arg1: memref<32x8xf32, #tpu.memory_space<vmem>>, %arg2: memref<32x1xi32, #tpu.memory_space<vmem>>, %arg3: memref<1x1x1xf32, #tpu.memory_space<vmem>>) attributes {dimension_semantics = [#tpu.dimension_semantics<arbitrary>], iteration_bounds = array<i64: 1>, scalar_prefetch = 0 : i64, scratch_operands = 0 : i64, tpu.core_type = #tpu.core_type<tc>, window_params = [{transform_indices = @transform_0, window_bounds = array<i64: 32, 8>}, {transform_indices = @transform_1, window_bounds = array<i64: 32, 1>}, {pipeline_mode = #tpu.pipeline_mode<synchronous>, transform_indices = @transform_2, window_bounds = array<i64: 1, 1, 1>}]} {
    %c0_i32 = arith.constant 0 : i32
    %0 = arith.addi %c0_i32, %arg0 : i32
    %c0_i32_0 = arith.constant 0 : i32
    %1 = arith.cmpi eq, %arg0, %c0_i32_0 : i32
    %2 = arith.extui %1 : i1 to i32
    %c0_i32_1 = arith.constant 0 : i32
    %3 = arith.cmpi ne, %2, %c0_i32_1 : i32
    scf.if %3 {
      %cst_20 = arith.constant 0.000000e+00 : f32
      %47 = vector.broadcast %cst_20 : f32 to vector<1x1x1xf32>
      %c0_21 = arith.constant 0 : index
      %c0_22 = arith.constant 0 : index
      %c0_23 = arith.constant 0 : index
      %48 = vector.load %arg3[%c0_21, %c0_22, %c0_23] : memref<1x1x1xf32, #tpu.memory_space<vmem>>, vector<1x1x1xf32>
      tpu.vector_store %arg3[%c0_21, %c0_22, %c0_23], %47 {strides = array<i32>} : memref<1x1x1xf32, #tpu.memory_space<vmem>>, vector<1x1x1xf32>,
    } else {
    }
    %c0 = arith.constant 0 : index
    %c0_2 = arith.constant 0 : index
    %4 = vector.load %arg1[%c0, %c0_2] : memref<32x8xf32, #tpu.memory_space<vmem>>, vector<32x8xf32>
    %c0_3 = arith.constant 0 : index
    %c0_4 = arith.constant 0 : index
    %5 = vector.load %arg2[%c0_3, %c0_4] : memref<32x1xi32, #tpu.memory_space<vmem>>, vector<32x1xi32>
    %6 = tpu.iota {dimensions = array<i32: 1>} : vector<32x8xi32>
    %7 = vector.broadcast %5 : vector<32x1xi32> to vector<32x8xi32>
    %8 = arith.cmpi eq, %6, %7 : vector<32x8xi32>
    %cst = arith.constant dense<0xFF800000> : vector<32xf32>
    %9 = vector.multi_reduction <maximumf>, %4, %cst [1] : vector<32x8xf32> to vector<32xf32>
    %10 = vector.shape_cast %9 : vector<32xf32> to vector<32x1xf32>
    %11 = vector.broadcast %10 : vector<32x1xf32> to vector<32x8xf32>
    %12 = arith.subf %4, %11 : vector<32x8xf32>
    %13 = math.exp %12 : vector<32x8xf32>
    %cst_5 = arith.constant dense<0.000000e+00> : vector<32xf32>
    %14 = vector.multi_reduction <add>, %13, %cst_5 [1] : vector<32x8xf32> to vector<32xf32>
    %15 = vector.shape_cast %14 : vector<32xf32> to vector<32x1xf32>
    %cst_6 = arith.constant 0.000000e+00 : f32
    %16 = vector.broadcast %cst_6 : f32 to vector<32x8xf32>
    %17 = arith.select %8, %12, %16 : vector<32x8xi1>, vector<32x8xf32>
    %cst_7 = arith.constant dense<0.000000e+00> : vector<32xf32>
    %18 = vector.multi_reduction <add>, %17, %cst_7 [1] : vector<32x8xf32> to vector<32xf32>
    %19 = vector.shape_cast %18 : vector<32xf32> to vector<32x1xf32>
    %20 = math.log %15 : vector<32x1xf32>
    %21 = arith.subf %20, %19 : vector<32x1xf32>
    %cst_8 = arith.constant 0.000000e+00 : f32
    %22 = vector.broadcast %cst_8 : f32 to vector<32x1xf32>
    %23 = arith.subf %22, %21 : vector<32x1xf32>
    %24 = math.exp %23 : vector<32x1xf32>
    %cst_9 = arith.constant 1.000000e+00 : f32
    %25 = vector.broadcast %cst_9 : f32 to vector<32x1xf32>
    %26 = arith.subf %25, %24 : vector<32x1xf32>
    %27 = arith.mulf %26, %26 : vector<32x1xf32>
    %cst_10 = arith.constant 2.500000e-01 : f32
    %28 = vector.broadcast %cst_10 : f32 to vector<32x1xf32>
    %29 = arith.mulf %28, %27 : vector<32x1xf32>
    %30 = arith.mulf %29, %21 : vector<32x1xf32>
    %31 = tpu.iota {dimensions = array<i32: 0>} : vector<32x1xi32>
    %c32_i32 = arith.constant 32 : i32
    %32 = arith.muli %0, %c32_i32 : i32
    %33 = vector.broadcast %32 : i32 to vector<32x1xi32>
    %34 = arith.addi %33, %31 : vector<32x1xi32>
    %c32_i32_11 = arith.constant 32 : i32
    %35 = vector.broadcast %c32_i32_11 : i32 to vector<32x1xi32>
    %36 = arith.cmpi slt, %34, %35 : vector<32x1xi32>
    %cst_12 = arith.constant 0.000000e+00 : f32
    %37 = vector.broadcast %cst_12 : f32 to vector<32x1xf32>
    %38 = arith.select %36, %30, %37 : vector<32x1xi1>, vector<32x1xf32>
    %c0_13 = arith.constant 0 : index
    %c0_14 = arith.constant 0 : index
    %c0_15 = arith.constant 0 : index
    %39 = vector.load %arg3[%c0_13, %c0_14, %c0_15] : memref<1x1x1xf32, #tpu.memory_space<vmem>>, vector<1x1x1xf32>
    %40 = vector.shape_cast %38 : vector<32x1xf32> to vector<1x32x1xf32>
    %cst_16 = arith.constant dense<0.000000e+00> : vector<1xf32>
    %41 = vector.multi_reduction <add>, %40, %cst_16 [1, 2] : vector<1x32x1xf32> to vector<1xf32>
    %42 = vector.shape_cast %41 : vector<1xf32> to vector<1x1x1xf32>
    %43 = vector.extract %42[0, 0, 0] : f32 from vector<1x1x1xf32>
    %44 = vector.broadcast %43 : f32 to vector<1x1x1xf32>
    %45 = arith.addf %39, %44 : vector<1x1x1xf32>
    %c0_17 = arith.constant 0 : index
    %c0_18 = arith.constant 0 : index
    %c0_19 = arith.constant 0 : index
    %46 = vector.load %arg3[%c0_17, %c0_18, %c0_19] : memref<1x1x1xf32, #tpu.memory_space<vmem>>, vector<1x1x1xf32>
    tpu.vector_store %arg3[%c0_17, %c0_18, %c0_19], %45 {strides = array<i32>} : memref<1x1x1xf32, #tpu.memory_space<vmem>>, vector<1x1x1xf32>,
    return
  }
  func.func @transform_0(%arg0: i32) -> (i32, i32) {
    %c0_i32 = arith.constant 0 : i32
    %c0_i32_0 = arith.constant 0 : i32
    return %arg0, %c0_i32 : i32, i32
  }
  func.func @transform_1(%arg0: i32) -> (i32, i32) {
    %c0_i32 = arith.constant 0 : i32
    %c0_i32_0 = arith.constant 0 : i32
    return %arg0, %c0_i32 : i32, i32
  }
  func.func @transform_2(%arg0: i32) -> (i32, i32, i32) {
    %c0_i32 = arith.constant 0 : i32
    %c0_i32_0 = arith.constant 0 : i32
    %c0_i32_1 = arith.constant 0 : i32
    %c0_i32_2 = arith.constant 0 : i32
    return %c0_i32, %c0_i32_0, %c0_i32_1 : i32, i32, i32
  }
}

</mosaic_0001>

<llo_original>
// kernel: tpu_custom_call.1
$region0: #{tpu_custom_call.1}
  #allocation0 [shape = 'u32[]', space=smem, size = 0x4, offset = 0x4, fixed_abs, tag = 'smem constant byte address 0x4 - core index']
  #allocation1 [shape = 'u32[144,128]{1,0:T(1,128)}', space=vmem, size = 0x12000, scoped, tag = 'internal scratch']
  %s0 = inlined_call_operand.vmem [shape: f32[32,8], index: 0, kind: input, shape index: {}]
  %s1 = inlined_call_operand.vmem [shape: s32[32,1], index: 1, kind: input, shape index: {}]
  %s2 = inlined_call_operand.hbm [shape: f32[1,1,1], index: 2, kind: output, shape index: {}]
  %s3 = sld [smem:[#allocation0]]
  $region22: #{tpu_custom_call.1} parent=0
    _
  %s5 = ssub.s32 1, %s3
  %s6 = scalar_select 0, %s5, %s3
  $region1: #{tpu_custom_call.1} parent=0
    #allocation2 [shape = 'u8[512]{0}', space=vmem, size = 0x400, scoped, tag = 'output window, operand 0, single buffered']
    #allocation3 [shape = 's32[1]{0}', space=sflag, size = 0x4, scoped, tag = 'scoped memory for tpu_custom_call.1']
    %7 = vsyncpa [#allocation3], 0
    // Predicated region
    $region2: #{tpu_custom_call.1} parent=1 // pred_check
      _
    $region3: #{tpu_custom_call.1} parent=1 // pred_check_branch
      %9 = sbr.rel (0) target = $region5
    $region4: #{tpu_custom_call.1} parent=1 // pred_region
      _
    $region5: #{tpu_custom_call.1} parent=1 // pred_fallthru
      _
    // Predicated region
    $region6: #{tpu_custom_call.1} parent=1 // pred_check
      _
    $region7: #{tpu_custom_call.1} parent=1 // pred_check_branch
      %11 = sbr.rel (0) target = $region9
    $region8: #{tpu_custom_call.1} parent=1 // pred_region
      _
    $region9: #{tpu_custom_call.1} parent=1 // pred_fallthru
      _
    %p12 = scmp.eq.s32.totalorder 0, 0
    // Predicated region
    $region10: #{tpu_custom_call.1} parent=1 // pred_check
      %p13 = pneg %p12
    $region11: #{tpu_custom_call.1} parent=1 // pred_check_branch
      %15 = sbr.rel (%p13) target = $region13
    $region12: #{tpu_custom_call.1} parent=1 // pred_region
      %vm16 = vcmask 0
      %17 = vst.msk [vmem:[#allocation2] sm:$0x1] %vm16, 0.0
    $region13: #{tpu_custom_call.1} parent=1 // pred_fallthru
      _
    %v18 = vld [vmem:[%s0] sm:$0xff]
    %v19 = vld [vmem:[%s0 + $0x8] sm:$0xff]
    %v20 = vld [vmem:[%s0 + $0x10] sm:$0xff]
    %v21 = vld [vmem:[%s0 + $0x18] sm:$0xff]
    %v22 = vld [vmem:[%s1] sm:$0xff]
    %v23 = vld [vmem:[%s1 + $0x8] sm:$0xff]
    %v24 = vld [vmem:[%s1 + $0x10] sm:$0xff]
    %v25 = vld [vmem:[%s1 + $0x18] sm:$0xff]
    %v26 = vlaneseq
    %v27 = vand.u32 %v26, 127
    %28 = vset.pattern.permute.xlu0 0
    %29 = vperm.xlu0 %28, %v22
    %v30 = vpop.permute.xlu0 %29
    %31 = vset.pattern.permute.xlu0 0
    %32 = vperm.xlu0 %31, %v23
    %v33 = vpop.permute.xlu0 %32
    %34 = vset.pattern.permute.xlu0 0
    %35 = vperm.xlu0 %34, %v24
    %v36 = vpop.permute.xlu0 %35
    %37 = vset.pattern.permute.xlu0 0
    %38 = vperm.xlu0 %37, %v25
    %v39 = vpop.permute.xlu0 %38
    %vm40 = vcmp.eq.s32.totalorder %v27, %v30
    %vm41 = vcmp.eq.s32.totalorder %v27, %v33
    %vm42 = vcmp.eq.s32.totalorder %v27, %v36
    %vm43 = vcmp.eq.s32.totalorder %v27, %v39
    %vm44 = vcmask 64512
    %v45 = vsel %vm44, %v18, -inf
    %46 = vmax.xlane.f32.xlu0 %v45
    %v47 = vpop.xlane.xlu0 %46
    %v48 = vsel %vm44, %v19, -inf
    %49 = vmax.xlane.f32.xlu0 %v48
    %v50 = vpop.xlane.xlu0 %49
    %v51 = vsel %vm44, %v20, -inf
    %52 = vmax.xlane.f32.xlu0 %v51
    %v53 = vpop.xlane.xlu0 %52
    %v54 = vsel %vm44, %v21, -inf
    %55 = vmax.xlane.f32.xlu0 %v54
    %v56 = vpop.xlane.xlu0 %55
    %v57 = vsub.f32 %v18, %v47
    %v58 = vsub.f32 %v19, %v50
    %v59 = vsub.f32 %v20, %v53
    %v60 = vsub.f32 %v21, %v56
    %v61 = vmul.f32 %v57, 1.442695
    %v62 = vpow.pop %v61
    %v63 = vmul.f32 %v58, 1.442695
    %v64 = vpow.pop %v63
    %v65 = vmul.f32 %v59, 1.442695
    %v66 = vpow.pop %v65
    %v67 = vmul.f32 %v60, 1.442695
    %v68 = vpow.pop %v67
    %v69 = vsel %vm44, %v62, 0.0
    %70 = vadd.xlane.f32.xlu0 %v69
    %v71 = vpop.xlane.xlu0 %70
    %v72 = vsel %vm44, %v64, 0.0
    %73 = vadd.xlane.f32.xlu0 %v72
    %v74 = vpop.xlane.xlu0 %73
    %v75 = vsel %vm44, %v66, 0.0
    %76 = vadd.xlane.f32.xlu0 %v75
    %v77 = vpop.xlane.xlu0 %76
    %v78 = vsel %vm44, %v68, 0.0
    %79 = vadd.xlane.f32.xlu0 %v78
    %v80 = vpop.xlane.xlu0 %79
    %v81 = vsel %vm40, %v57, 0.0
    %v82 = vsel %vm41, %v58, 0.0
    %v83 = vsel %vm42, %v59, 0.0
    %v84 = vsel %vm43, %v60, 0.0
    %v85 = vsel %vm44, %v81, 0.0
    %86 = vadd.xlane.f32.xlu0 %v85
    %v87 = vpop.xlane.xlu0 %86
    %v88 = vsel %vm44, %v82, 0.0
    %89 = vadd.xlane.f32.xlu0 %v88
    %v90 = vpop.xlane.xlu0 %89
    %v91 = vsel %vm44, %v83, 0.0
    %92 = vadd.xlane.f32.xlu0 %v91
    %v93 = vpop.xlane.xlu0 %92
    %v94 = vsel %vm44, %v84, 0.0
    %95 = vadd.xlane.f32.xlu0 %v94
    %v96 = vpop.xlane.xlu0 %95
    %v97 = vlog2.pop %v71
    %v98 = vmul.f32 %v97, 0.6931472
    %v99 = vlog2.pop %v74
    %v100 = vmul.f32 %v99, 0.6931472
    %v101 = vlog2.pop %v77
    %v102 = vmul.f32 %v101, 0.6931472
    %v103 = vlog2.pop %v80
    %v104 = vmul.f32 %v103, 0.6931472
    %v105 = vsub.f32 %v98, %v87
    %v106 = vsub.f32 %v100, %v90
    %v107 = vsub.f32 %v102, %v93
    %v108 = vsub.f32 %v104, %v96
    %v109 = vsub.f32 0.0, %v105
    %v110 = vsub.f32 0.0, %v106
    %v111 = vsub.f32 0.0, %v107
    %v112 = vsub.f32 0.0, %v108
    %v113 = vmul.f32 %v109, 1.442695
    %v114 = vpow.pop %v113
    %v115 = vmul.f32 %v110, 1.442695
    %v116 = vpow.pop %v115
    %v117 = vmul.f32 %v111, 1.442695
    %v118 = vpow.pop %v117
    %v119 = vmul.f32 %v112, 1.442695
    %v120 = vpow.pop %v119
    %v121 = vsub.f32 1.0, %v114
    %v122 = vsub.f32 1.0, %v116
    %v123 = vsub.f32 1.0, %v118
    %v124 = vsub.f32 1.0, %v120
    %v125 = vmul.f32 %v121, %v121
    %v126 = vmul.f32 %v122, %v122
    %v127 = vmul.f32 %v123, %v123
    %v128 = vmul.f32 %v124, %v124
    %v129 = vmul.f32 %v125, 0.25
    %v130 = vmul.f32 %v126, 0.25
    %v131 = vmul.f32 %v127, 0.25
    %v132 = vmul.f32 %v128, 0.25
    %v133 = vmul.f32 %v129, %v105
    %v134 = vmul.f32 %v130, %v106
    %v135 = vmul.f32 %v131, %v107
    %v136 = vmul.f32 %v132, %v108
    %v137 = vlaneseq
    %v138 = vshrl.u32 %v137, 7
    %v139 = vadd.s32 %v138, 8
    %v140 = vadd.s32 %v138, 16
    %v141 = vadd.s32 %v138, 24
    %s142 = smul.u32 0, 32
    %v143 = vstv %s142
    %v144 = vadd.s32 %v143, %v138
    %v145 = vadd.s32 %v143, %v139
    %v146 = vadd.s32 %v143, %v140
    %v147 = vadd.s32 %v143, %v141
    %vm148 = vcmp.lt.s32.totalorder %v144, 32
    %vm149 = vcmp.lt.s32.totalorder %v145, 32
    %vm150 = vcmp.lt.s32.totalorder %v146, 32
    %vm151 = vcmp.lt.s32.totalorder %v147, 32
    %v152 = vsel %vm148, %v133, 0.0
    %v153 = vsel %vm149, %v134, 0.0
    %v154 = vsel %vm150, %v135, 0.0
    %v155 = vsel %vm151, %v136, 0.0
    %v156 = vld [vmem:[#allocation2] sm:$0x1]
    %vm157 = vcmask 7168
    %v158 = vsel %vm157, %v152, 0.0
    %v159 = vsel %vm157, %v153, 0.0
    %v160 = vadd.f32 %v158, %v159
    %v161 = vsel %vm157, %v154, 0.0
    %v162 = vadd.f32 %v160, %v161
    %v163 = vsel %vm157, %v155, 0.0
    %v164 = vadd.f32 %v162, %v163
    %165 = vadd.xlane.f32.xlu0 %v164
    %v166 = vpop.xlane.xlu0 %165
    %v167 = vrot.slane %v166, 4
    %v168 = vadd.f32 %v166, %v167
    %v169 = vrot.slane %v168, 2
    %v170 = vadd.f32 %v168, %v169
    %v171 = vrot.slane %v170, 1
    %v172 = vadd.f32 %v170, %v171
    %s173 = vtos %v172
    %v174 = vstv %s173
    %v175 = vadd.f32 %v156, %v174
    %vm176 = vcmask 0
    %177 = vst.msk [vmem:[#allocation2] sm:$0x1] %vm176, %v175
    // Predicated region
    $region14: #{tpu_custom_call.1} parent=1 // pred_check
      _
    $region15: #{tpu_custom_call.1} parent=1 // pred_check_branch
      %179 = sbr.rel (0) target = $region17
    $region16: #{tpu_custom_call.1} parent=1 // pred_region
      %s181 = ssub.s32 16, 16
      %182 = vsyncadd [#allocation3], %s181
      %s184 = sshll.u32 [#allocation2], 4
      %s185 = int_to_ptr.vmem [resolvable:$true] %s184
      %187 = dma.vmem_to_hbm [thread:$0]  %s185, 16, %s2, [#allocation3]
    $region17: #{tpu_custom_call.1} parent=1 // pred_fallthru
      _
    // Predicated region
    $region18: #{tpu_custom_call.1} parent=1 // pred_check
      _
    $region19: #{tpu_custom_call.1} parent=1 // pred_check_branch
      %189 = sbr.rel (0) target = $region21
    $region20: #{tpu_custom_call.1} parent=1 // pred_region
      %190 = dma.done [#allocation3], 16
    $region21: #{tpu_custom_call.1} parent=1 // pred_fallthru
      _
    %191 = vsyncpa [#allocation3], 1

</llo_original>
